<compile_context>
chip_gen: v6e
topology: v6e:2x2x1
jax: 0.10.0
libtpu: 0.0.40
codegen_flags: <defaults>
</compile_context>

<pallas_src>
import functools

import jax
import jax.numpy as jnp
import numpy as np
from jax.experimental import pallas as pl
from jax.experimental.pallas import tpu as pltpu


def _round_up(a, b):
    return (a + b - 1) // b * b


def _prenet_kernel(seed_ref, x_ref, w1_ref, b1_ref, w2_ref, b2_ref, o_ref,
                   *, drop_threshold, keep_scale, training):
    """Fused: (x @ W1 + b1) -> relu -> dropout -> (@ W2 + b2) -> relu -> dropout."""
    use_dropout = training and drop_threshold > 0
    tm = x_ref.shape[0]                      # rows in this tile (static)

    def random_bits(shape, salt):
        # Stateless counter-based hash: mixes (seed, global_row, col, salt)
        # non-additively, then murmur3 fmix32 finalizer.  Pure uint32 VALU ops,
        # portable to interpret mode, order-independent across tiles.
        row = jax.lax.broadcasted_iota(jnp.uint32, shape, 0)
        col = jax.lax.broadcasted_iota(jnp.uint32, shape, 1)
        row = row + (pl.program_id(0) * tm).astype(jnp.uint32)
        seed = seed_ref[0].astype(jnp.uint32)
        h = row * jnp.uint32(0x9E3779B1)
        h = h ^ (col * jnp.uint32(0x85EBCA77))
        h = h ^ (seed * jnp.uint32(0xC2B2AE3D))
        h = h + jnp.uint32((salt * 0x27D4EB2F) & 0xFFFFFFFF)
        h = h ^ (h >> 16)
        h = h * jnp.uint32(0x85EBCA6B)
        h = h ^ (h >> 13)
        h = h * jnp.uint32(0xC2B2AE35)
        h = h ^ (h >> 16)
        return h

    def dropout(h, salt):
        if not use_dropout:
            return h
        bits = random_bits(h.shape, salt)
        keep = bits >= jnp.uint32(drop_threshold)     # P(drop) = threshold / 2^32
        return jnp.where(keep, h * keep_scale, 0.0)   # integer-domain mask

    # Layer 1: Linear + ReLU + Dropout  (MXU in compute dtype, f32 accumulate,
    # f32 elementwise epilogue -> v5e-friendly even with bf16 inputs).
    h = jnp.dot(x_ref[...], w1_ref[...], preferred_element_type=jnp.float32)
    h = jnp.maximum(h + b1_ref[...], 0.0)
    h = dropout(h, salt=1)

    # Layer 2: Linear + ReLU + Dropout
    y = jnp.dot(h.astype(w2_ref.dtype), w2_ref[...],
                preferred_element_type=jnp.float32)
    y = jnp.maximum(y + b2_ref[...], 0.0)
    y = dropout(y, salt=2)

    o_ref[...] = y.astype(o_ref.dtype)


def prenet_forward(x, params, *, dropout_p=0.5, training=True, seed=0,
                   tm=None, compute_dtype=jnp.bfloat16, out_dtype=None):
    """x: (..., in_dim).  params = (w1, b1, w2, b2) with
    w1: (in_dim, hidden), b1: (hidden,), w2: (hidden, out), b2: (out,)."""
    w1, b1, w2, b2 = params
    in_dim, hidden = w1.shape
    out_dim = w2.shape[1]
    if out_dtype is None:
        out_dtype = x.dtype

    if training and not (0.0 <= float(dropout_p) < 1.0):
        raise ValueError(f"dropout_p must be in [0, 1) when training, got {dropout_p}")

    orig_lead = x.shape[:-1]
    x2 = x.reshape(-1, in_dim).astype(compute_dtype)
    n_rows = x2.shape[0]

    # Row tile: multiple of 8 (sublane), capped so multi-step grids pipeline
    # HBM DMA against compute and fit comfortably in VMEM (v7x: 64 MiB phys).
    if tm is None:
        tm = min(_round_up(max(n_rows, 1), 8), 1024)
    tm = max(8, _round_up(int(tm), 8))
    padded_rows = _round_up(n_rows, tm)
    if padded_rows != n_rows:
        x2 = jnp.pad(x2, ((0, padded_rows - n_rows), (0, 0)))

    w1c = w1.astype(compute_dtype)
    w2c = w2.astype(compute_dtype)
    b1r = b1.astype(jnp.float32).reshape(1, hidden)
    b2r = b2.astype(jnp.float32).reshape(1, out_dim)
    seed_arr = jnp.asarray([seed], dtype=jnp.int32)

    drop_threshold = min(int(round(float(dropout_p) * (1 << 32))), (1 << 32) - 1)
    keep_scale = 1.0 / (1.0 - float(dropout_p)) if float(dropout_p) < 1.0 else 0.0

    kernel = functools.partial(_prenet_kernel,
                               drop_threshold=drop_threshold,
                               keep_scale=keep_scale,
                               training=bool(training))

    # NOTE: keep dec_hidden_dim a multiple of 128 (or pack rows in the wrapper)
    # so output stores are lane-dense unmasked vst.
    out = pl.pallas_call(
        kernel,
        out_shape=jax.ShapeDtypeStruct((padded_rows, out_dim), out_dtype),
        grid_spec=pltpu.PrefetchScalarGridSpec(
            num_scalar_prefetch=1,            # seed lands in SMEM
            grid=(padded_rows // tm,),
            in_specs=[
                pl.BlockSpec((tm, in_dim),      lambda i, seed: (i, 0)),
                pl.BlockSpec((in_dim, hidden),  lambda i, seed: (0, 0)),
                pl.BlockSpec((1, hidden),       lambda i, seed: (0, 0)),
                pl.BlockSpec((hidden, out_dim), lambda i, seed: (0, 0)),
                pl.BlockSpec((1, out_dim),      lambda i, seed: (0, 0)),
            ],
            out_specs=pl.BlockSpec((tm, out_dim), lambda i, seed: (i, 0)),
        ),
        compiler_params=pltpu.CompilerParams(
            # Stateless per-element hash -> tiles independent of execution
            # order, so the row-tile axis can be sharded across v7x's 2 TCs.
            dimension_semantics=("parallel",)),
    )(seed_arr, x2, w1c, b1r, w2c, b2r)

    if padded_rows != n_rows:
        out = out[:n_rows]
    return out.reshape(orig_lead + (out_dim,))


def init_prenet_params(key, in_dim, dec_hidden_dim, hidden_dim):
    """Deterministic init matching nn.Linear's U(-1/sqrt(fan_in), 1/sqrt(fan_in))."""
    k1, k2, k3, k4 = jax.random.split(key, 4)
    bnd1 = 1.0 / np.sqrt(in_dim)
    bnd2 = 1.0 / np.sqrt(hidden_dim)
    w1 = jax.random.uniform(k1, (in_dim, hidden_dim), jnp.float32, -bnd1, bnd1)
    b1 = jax.random.uniform(k2, (hidden_dim,), jnp.float32, -bnd1, bnd1)
    w2 = jax.random.uniform(k3, (hidden_dim, dec_hidden_dim), jnp.float32, -bnd2, bnd2)
    b2 = jax.random.uniform(k4, (dec_hidden_dim,), jnp.float32, -bnd2, bnd2)
    return w1, b1, w2, b2


if __name__ == "__main__":
    key = jax.random.PRNGKey(0)
    kp, kx = jax.random.split(key)

    # Small shapes consistent with the module defaults: hidden_dim=256,
    # in_dim=80 (mel features), dec_hidden_dim=128 (lane-dense output),
    # batch=2, seq=8  ->  N = 16 rows.
    B, T = 2, 8
    in_dim, hidden_dim, dec_hidden_dim = 80, 256, 128

    params = init_prenet_params(kp, in_dim, dec_hidden_dim, hidden_dim)
    x = jax.random.normal(kx, (B, T, in_dim), jnp.float32)

    w1, b1, w2, b2 = params
    ref = jnp.maximum(
        jnp.maximum(x.reshape(-1, in_dim) @ w1 + b1, 0.0) @ w2 + b2, 0.0
    ).reshape(B, T, dec_hidden_dim)

    # Eval-mode check, f32 MXU inputs (dropout = identity) vs pure-JAX ref.
    y_eval_f32 = prenet_forward(x, params, training=False,
                                compute_dtype=jnp.float32)
    np.testing.assert_allclose(np.asarray(y_eval_f32), np.asarray(ref),
                               rtol=2e-3, atol=2e-3)

    # Eval-mode check, bf16 MXU inputs (f32 accumulation / f32 epilogue).
    y_eval_bf16 = prenet_forward(x, params, training=False,
                                 compute_dtype=jnp.bfloat16)
    np.testing.assert_allclose(np.asarray(y_eval_bf16), np.asarray(ref),
                               rtol=5e-2, atol=5e-2)

    # Training-mode run (PyTorch module default training=True: dropout active,
    # integer-domain mask from the in-kernel counter hash, deterministic seed).
    y_train = prenet_forward(x, params, training=True, seed=0)
    jax.block_until_ready(y_train)
    assert y_train.shape == (B, T, dec_hidden_dim)
    assert bool(jnp.all(jnp.isfinite(y_train)))

    # Same seed -> identical masks; different seed -> different output.
    y_train_again = prenet_forward(x, params, training=True, seed=0)
    assert bool(jnp.array_equal(y_train, y_train_again))
    y_train_other = prenet_forward(x, params, training=True, seed=123)
    assert not bool(jnp.array_equal(y_train, y_train_other))

    print("KERNEL_OK")
</pallas_src>

<mosaic_0001>
module attributes {stable_mosaic.version = 11 : i64} {
  func.func @_prenet_kernel(%arg0: i32, %arg1: memref<1xi32, #tpu.memory_space<smem>>, %arg2: memref<16x80xf32, #tpu.memory_space<vmem>>, %arg3: memref<80x256xf32, #tpu.memory_space<vmem>>, %arg4: memref<1x256xf32, #tpu.memory_space<vmem>>, %arg5: memref<256x128xf32, #tpu.memory_space<vmem>>, %arg6: memref<1x128xf32, #tpu.memory_space<vmem>>, %arg7: memref<16x128xf32, #tpu.memory_space<vmem>>) attributes {dimension_semantics = [#tpu.dimension_semantics<parallel>], iteration_bounds = array<i64: 1>, scalar_prefetch = 1 : i64, scratch_operands = 0 : i64, tpu.core_type = #tpu.core_type<tc>, window_params = [{transform_indices = @transform_0, window_bounds = array<i64: 16, 80>}, {pipeline_mode = #tpu.pipeline_mode<synchronous>, transform_indices = @transform_1, window_bounds = array<i64: 80, 256>}, {pipeline_mode = #tpu.pipeline_mode<synchronous>, transform_indices = @transform_2, window_bounds = array<i64: 1, 256>}, {pipeline_mode = #tpu.pipeline_mode<synchronous>, transform_indices = @transform_3, window_bounds = array<i64: 256, 128>}, {pipeline_mode = #tpu.pipeline_mode<synchronous>, transform_indices = @transform_4, window_bounds = array<i64: 1, 128>}, {transform_indices = @transform_5, window_bounds = array<i64: 16, 128>}]} {
    %c0 = arith.constant 0 : index
    %c0_0 = arith.constant 0 : index
    %0 = vector.load %arg2[%c0, %c0_0] : memref<16x80xf32, #tpu.memory_space<vmem>>, vector<16x80xf32>
    %c0_1 = arith.constant 0 : index
    %c0_2 = arith.constant 0 : index
    %1 = vector.load %arg3[%c0_1, %c0_2] : memref<80x256xf32, #tpu.memory_space<vmem>>, vector<80x256xf32>
    %cst = arith.constant dense<0.000000e+00> : vector<16x256xf32>
    %2 = tpu.matmul %0, %1, %cst {dimension_numbers = #tpu.dot_dimension_numbers<[1], [0], [0], [1], [0, 0, 1, 1], [], []>} : vector<16x80xf32>, vector<80x256xf32>, vector<16x256xf32> -> vector<16x256xf32>
    %c0_3 = arith.constant 0 : index
    %c0_4 = arith.constant 0 : index
    %3 = vector.load %arg4[%c0_3, %c0_4] : memref<1x256xf32, #tpu.memory_space<vmem>>, vector<1x256xf32>
    %4 = vector.broadcast %3 : vector<1x256xf32> to vector<16x256xf32>
    %5 = arith.addf %2, %4 : vector<16x256xf32>
    %cst_5 = arith.constant 0.000000e+00 : f32
    %6 = vector.broadcast %cst_5 : f32 to vector<16x256xf32>
    %7 = arith.maximumf %5, %6 : vector<16x256xf32>
    %c0_6 = arith.constant 0 : index
    %c0_7 = arith.constant 0 : index
    %8 = vector.load %arg5[%c0_6, %c0_7] : memref<256x128xf32, #tpu.memory_space<vmem>>, vector<256x128xf32>
    %cst_8 = arith.constant dense<0.000000e+00> : vector<16x128xf32>
    %9 = tpu.matmul %7, %8, %cst_8 {dimension_numbers = #tpu.dot_dimension_numbers<[1], [0], [0], [1], [0, 0, 1, 1], [], []>} : vector<16x256xf32>, vector<256x128xf32>, vector<16x128xf32> -> vector<16x128xf32>
    %c0_9 = arith.constant 0 : index
    %c0_10 = arith.constant 0 : index
    %10 = vector.load %arg6[%c0_9, %c0_10] : memref<1x128xf32, #tpu.memory_space<vmem>>, vector<1x128xf32>
    %11 = vector.broadcast %10 : vector<1x128xf32> to vector<16x128xf32>
    %12 = arith.addf %9, %11 : vector<16x128xf32>
    %cst_11 = arith.constant 0.000000e+00 : f32
    %13 = vector.broadcast %cst_11 : f32 to vector<16x128xf32>
    %14 = arith.maximumf %12, %13 : vector<16x128xf32>
    %c0_12 = arith.constant 0 : index
    %c0_13 = arith.constant 0 : index
    %15 = vector.load %arg7[%c0_12, %c0_13] : memref<16x128xf32, #tpu.memory_space<vmem>>, vector<16x128xf32>
    tpu.vector_store %arg7[%c0_12, %c0_13], %14 {strides = array<i32>} : memref<16x128xf32, #tpu.memory_space<vmem>>, vector<16x128xf32>,
    return
  }
  func.func @transform_0(%arg0: i32, %arg1: memref<1xi32, #tpu.memory_space<smem>>) -> (i32, i32) {
    %c0_i32 = arith.constant 0 : i32
    %c0_i32_0 = arith.constant 0 : i32
    return %arg0, %c0_i32 : i32, i32
  }
  func.func @transform_1(%arg0: i32, %arg1: memref<1xi32, #tpu.memory_space<smem>>) -> (i32, i32) {
    %c0_i32 = arith.constant 0 : i32
    %c0_i32_0 = arith.constant 0 : i32
    %c0_i32_1 = arith.constant 0 : i32
    return %c0_i32, %c0_i32_0 : i32, i32
  }
  func.func @transform_2(%arg0: i32, %arg1: memref<1xi32, #tpu.memory_space<smem>>) -> (i32, i32) {
    %c0_i32 = arith.constant 0 : i32
    %c0_i32_0 = arith.constant 0 : i32
    %c0_i32_1 = arith.constant 0 : i32
    return %c0_i32, %c0_i32_0 : i32, i32
  }
  func.func @transform_3(%arg0: i32, %arg1: memref<1xi32, #tpu.memory_space<smem>>) -> (i32, i32) {
    %c0_i32 = arith.constant 0 : i32
    %c0_i32_0 = arith.constant 0 : i32
    %c0_i32_1 = arith.constant 0 : i32
    return %c0_i32, %c0_i32_0 : i32, i32
  }
  func.func @transform_4(%arg0: i32, %arg1: memref<1xi32, #tpu.memory_space<smem>>) -> (i32, i32) {
    %c0_i32 = arith.constant 0 : i32
    %c0_i32_0 = arith.constant 0 : i32
    %c0_i32_1 = arith.constant 0 : i32
    return %c0_i32, %c0_i32_0 : i32, i32
  }
  func.func @transform_5(%arg0: i32, %arg1: memref<1xi32, #tpu.memory_space<smem>>) -> (i32, i32) {
    %c0_i32 = arith.constant 0 : i32
    %c0_i32_0 = arith.constant 0 : i32
    return %arg0, %c0_i32 : i32, i32
  }
}

</mosaic_0001>

<llo_original>
// kernel: tpu_custom_call.1
$region0: #{tpu_custom_call.1}
  #allocation0 [shape = 'u32[]', space=smem, size = 0x4, offset = 0x4, fixed_abs, tag = 'smem constant byte address 0x4 - core index']
  #allocation1 [shape = 'u32[144,128]{1,0:T(1,128)}', space=vmem, size = 0x12000, scoped, tag = 'internal scratch']
  #allocation2 [shape = 's32[1]{0}', space=sflag, size = 0x4, scoped, tag = 'scoped memory for tpu_custom_call.1']
  #allocation3 [shape = 's32[1]{0:T(128)S(6)}', space=smem, size = 0x200, scoped, tag = 'prefetched SMEM operand 0']
  %s0 = inlined_call_operand.<no memory space> [shape: s32[1], index: 0, kind: input, shape index: {}]
  %s1 = inlined_call_operand.hbm [shape: f32[16,80], index: 1, kind: input, shape index: {}]
  %s2 = inlined_call_operand.hbm [shape: f32[80,256], index: 2, kind: input, shape index: {}]
  %s3 = inlined_call_operand.vmem [shape: f32[1,256], index: 3, kind: input, shape index: {}]
  %s4 = inlined_call_operand.hbm [shape: f32[256,128], index: 4, kind: input, shape index: {}]
  %s5 = inlined_call_operand.vmem [shape: f32[1,128], index: 5, kind: input, shape index: {}]
  %s6 = inlined_call_operand.hbm [shape: f32[16,128], index: 6, kind: output, shape index: {}]
  %s7 = sld [smem:[#allocation0]]
  $region42: #{tpu_custom_call.1} parent=0
    _
  %s9 = ssub.s32 1, %s7
  %s10 = scalar_select 0, %s9, %s7
  %11 = sst [smem:[#allocation3]] %s0
  $region1: #{tpu_custom_call.1} parent=0
    #allocation4 [shape = 'u8[8192]{0}', space=vmem, size = 0x2000, scoped, tag = 'input window, operand 1, single buffered']
    #allocation5 [shape = 's32[1]{0}', space=sflag, size = 0x4, scoped, tag = 'scoped memory for tpu_custom_call.1']
    #allocation6 [shape = 's32[1]{0}', space=sflag, size = 0x4, scoped, tag = 'scoped memory for tpu_custom_call.1']
    #allocation7 [shape = 'u8[81920]{0}', space=vmem, size = 0x14000, scoped, tag = 'input window, operand 2, single buffered']
    #allocation8 [shape = 's32[1]{0}', space=sflag, size = 0x4, scoped, tag = 'scoped memory for tpu_custom_call.1']
    #allocation9 [shape = 'u8[131072]{0}', space=vmem, size = 0x20000, scoped, tag = 'input window, operand 4, single buffered']
    #allocation10 [shape = 'u8[8192]{0}', space=vmem, size = 0x2000, scoped, tag = 'output window, operand 0, single buffered']
    %12 = vsyncpa [#allocation5], 0
    %13 = vsyncpa [#allocation8], 0
    %14 = vsyncpa [#allocation6], 0
    // Predicated region
    $region2: #{tpu_custom_call.1} parent=1 // pred_check
      _
    $region3: #{tpu_custom_call.1} parent=1 // pred_check_branch
      %16 = sbr.rel (0) target = $region5
    $region4: #{tpu_custom_call.1} parent=1 // pred_region
      %s18 = ssub.s32 256, 256
      %19 = vsyncadd [#allocation5], %s18
      %s20 = sshll.u32 [#allocation4], 4
      %s21 = int_to_ptr.vmem [resolvable:$true] %s20
      %26 = dma.hbm_to_vmem [thread:$0]  %s1, 256, %s21, [#allocation5], 128, 128, 8
    $region5: #{tpu_custom_call.1} parent=1 // pred_fallthru
      _
    // Predicated region
    $region6: #{tpu_custom_call.1} parent=1 // pred_check
      _
    $region7: #{tpu_custom_call.1} parent=1 // pred_check_branch
      %28 = sbr.rel (0) target = $region9
    $region8: #{tpu_custom_call.1} parent=1 // pred_region
      %s30 = ssub.s32 2560, 2560
      %31 = vsyncadd [#allocation8], %s30
      %s32 = sshll.u32 [#allocation7], 4
      %s33 = int_to_ptr.vmem [resolvable:$true] %s32
      %38 = dma.hbm_to_vmem [thread:$0]  %s2, 2560, %s33, [#allocation8], 256, 256, 16
    $region9: #{tpu_custom_call.1} parent=1 // pred_fallthru
      _
    // Predicated region
    $region10: #{tpu_custom_call.1} parent=1 // pred_check
      _
    $region11: #{tpu_custom_call.1} parent=1 // pred_check_branch
      %40 = sbr.rel (0) target = $region13
    $region12: #{tpu_custom_call.1} parent=1 // pred_region
      _
    $region13: #{tpu_custom_call.1} parent=1 // pred_fallthru
      _
    // Predicated region
    $region14: #{tpu_custom_call.1} parent=1 // pred_check
      _
    $region15: #{tpu_custom_call.1} parent=1 // pred_check_branch
      %42 = sbr.rel (0) target = $region17
    $region16: #{tpu_custom_call.1} parent=1 // pred_region
      %s44 = ssub.s32 4096, 4096
      %45 = vsyncadd [#allocation8], %s44
      %s46 = sshll.u32 [#allocation9], 4
      %s47 = int_to_ptr.vmem [resolvable:$true] %s46
      %52 = dma.hbm_to_vmem [thread:$0]  %s4, 4096, %s47, [#allocation8], 128, 128, 8
    $region17: #{tpu_custom_call.1} parent=1 // pred_fallthru
      _
    // Predicated region
    $region18: #{tpu_custom_call.1} parent=1 // pred_check
      _
    $region19: #{tpu_custom_call.1} parent=1 // pred_check_branch
      %54 = sbr.rel (0) target = $region21
    $region20: #{tpu_custom_call.1} parent=1 // pred_region
      _
    $region21: #{tpu_custom_call.1} parent=1 // pred_fallthru
      _
    // Predicated region
    $region22: #{tpu_custom_call.1} parent=1 // pred_check
      _
    $region23: #{tpu_custom_call.1} parent=1 // pred_check_branch
      %56 = sbr.rel (0) target = $region25
    $region24: #{tpu_custom_call.1} parent=1 // pred_region
      %57 = dma.done [#allocation5], 256
    $region25: #{tpu_custom_call.1} parent=1 // pred_fallthru
      _
    // Predicated region
    $region26: #{tpu_custom_call.1} parent=1 // pred_check
      _
    $region27: #{tpu_custom_call.1} parent=1 // pred_check_branch
      %59 = sbr.rel (0) target = $region29
    $region28: #{tpu_custom_call.1} parent=1 // pred_region
      %60 = dma.done [#allocation8], 2560
    $region29: #{tpu_custom_call.1} parent=1 // pred_fallthru
      _
    // Predicated region
    $region30: #{tpu_custom_call.1} parent=1 // pred_check
      _
    $region31: #{tpu_custom_call.1} parent=1 // pred_check_branch
      %62 = sbr.rel (0) target = $region33
    $region32: #{tpu_custom_call.1} parent=1 // pred_region
      %63 = dma.done [#allocation8], 4096
    $region33: #{tpu_custom_call.1} parent=1 // pred_fallthru
      _
    %v64 = vld [vmem:[#allocation4] sm:$0xff]
    %v65 = vld [vmem:[#allocation4 + $0x8] sm:$0xff]
    %v66 = vld [vmem:[#allocation7] sm:$0xff]
    %v67 = vld [vmem:[#allocation7 + $0x8] sm:$0xff]
    %v68 = vld [vmem:[#allocation7 + $0x10] sm:$0xff]
    %v69 = vld [vmem:[#allocation7 + $0x18] sm:$0xff]
    %v70 = vld [vmem:[#allocation7 + $0x20] sm:$0xff]
    %v71 = vld [vmem:[#allocation7 + $0x28] sm:$0xff]
    %v72 = vld [vmem:[#allocation7 + $0x30] sm:$0xff]
    %v73 = vld [vmem:[#allocation7 + $0x38] sm:$0xff]
    %v74 = vld [vmem:[#allocation7 + $0x40] sm:$0xff]
    %v75 = vld [vmem:[#allocation7 + $0x48] sm:$0xff]
    %v76 = vld [vmem:[#allocation7 + $0x50] sm:$0xff]
    %v77 = vld [vmem:[#allocation7 + $0x58] sm:$0xff]
    %v78 = vld [vmem:[#allocation7 + $0x60] sm:$0xff]
    %v79 = vld [vmem:[#allocation7 + $0x68] sm:$0xff]
    %v80 = vld [vmem:[#allocation7 + $0x70] sm:$0xff]
    %v81 = vld [vmem:[#allocation7 + $0x78] sm:$0xff]
    %v82 = vld [vmem:[#allocation7 + $0x80] sm:$0xff]
    %v83 = vld [vmem:[#allocation7 + $0x88] sm:$0xff]
    %v84 = vld [vmem:[#allocation7 + $0x90] sm:$0xff]
    %v85 = vld [vmem:[#allocation7 + $0x98] sm:$0xff]
    %v86 = vld [vmem:[%s3] sm:$0x3]
    %v88 = vlaneseq
    %v89 = vshrl.u32 %v88, 7
    %v90 = vsub.s32 0, %v89
    %v91 = vrot.slane %v86, %v90
    %v92 = vlaneseq
    %v93 = vshrl.u32 %v92, 7
    %v94 = vsub.s32 1, %v93
    %v95 = vrot.slane %v86, %v94
    %vm98 = vcmask 654336
    %v100 = vsel %vm98, %v64, 0
    %v103 = vsel %vm98, %v65, 0
    %105 = vmatprep.subr.mxu0 0.0
    %106 = vmatpush1.msra.mxu0 0.0
    %107 = vmatprep.subr.mxu0 0.0
    %108 = vmatpush1.msra.mxu0 0.0
    %109 = vmatprep.subr.mxu0 0.0
    %110 = vmatpush1.msra.mxu0 0.0
    %111 = vmatprep.subr.mxu0 0.0
    %112 = vmatpush1.msra.mxu0 0.0
    %113 = vmatprep.subr.mxu0 0.0
    %114 = vmatpush1.msra.mxu0 0.0
    %115 = vmatprep.subr.mxu0 0.0
    %116 = vmatpush1.msra.mxu0 0.0
    %117 = vmatprep.subr.mxu0 %v85
    %118 = vmatpush1.msra.mxu0 %v84
    %119 = vmatprep.subr.mxu0 %v83
    %120 = vmatpush1.msra.mxu0 %v82
    %121 = vmatprep.subr.mxu0 %v81
    %122 = vmatpush1.msra.mxu0 %v80
    %123 = vmatprep.subr.mxu0 %v79
    %124 = vmatpush1.msra.mxu0 %v78
    %125 = vmatprep.subr.mxu0 %v77
    %126 = vmatpush1.msra.mxu0 %v76
    %127 = vmatprep.subr.mxu0 %v75
    %128 = vmatpush1.msra.mxu0 %v74
    %129 = vmatprep.subr.mxu0 %v73
    %130 = vmatpush1.msra.mxu0 %v72
    %131 = vmatprep.subr.mxu0 %v71
    %132 = vmatpush1.msra.mxu0 %v70
    %133 = vmatprep.subr.mxu0 %v69
    %134 = vmatpush1.msra.mxu0 %v68
    %135 = vmatprep.subr.mxu0 %v67
    %136 = vmatpush1.msra.mxu0 %v66
    %137 = vmatprep.subr.mxu0 0.0
    %138 = vmatpush2.msra.mxu0 0.0
    %139 = vmatprep.subr.mxu0 0.0
    %140 = vmatpush2.msra.mxu0 0.0
    %141 = vmatprep.subr.mxu0 0.0
    %142 = vmatpush2.msra.mxu0 0.0
    %143 = vmatprep.subr.mxu0 0.0
    %144 = vmatpush2.msra.mxu0 0.0
    %145 = vmatprep.subr.mxu0 0.0
    %146 = vmatpush2.msra.mxu0 0.0
    %147 = vmatprep.subr.mxu0 0.0
    %148 = vmatpush2.msra.mxu0 0.0
    %149 = vmatprep.subr.mxu0 0.0
    %150 = vmatpush2.msra.mxu0 0.0
    %151 = vmatprep.subr.mxu0 0.0
    %152 = vmatpush2.msra.mxu0 0.0
    %153 = vmatprep.subr.mxu0 0.0
    %154 = vmatpush2.msra.mxu0 0.0
    %155 = vmatprep.subr.mxu0 0.0
    %156 = vmatpush2.msra.mxu0 0.0
    %157 = vmatprep.subr.mxu0 0.0
    %158 = vmatpush2.msra.mxu0 0.0
    %159 = vmatprep.subr.mxu0 0.0
    %160 = vmatpush2.msra.mxu0 0.0
    %161 = vmatprep.subr.mxu0 0.0
    %162 = vmatpush2.msra.mxu0 0.0
    %163 = vmatprep.subr.mxu0 0.0
    %164 = vmatpush2.msra.mxu0 0.0
    %165 = vmatprep.subr.mxu0 0.0
    %166 = vmatpush2.msra.mxu0 0.0
    %167 = vmatprep.subr.mxu0 0.0
    %168 = vmatpush2.msra.mxu0 0.0
    %169 = vmatprep.mubr.f32.mxu0 0.0
    %170 = vmatmul.mubr.f32.gmra.mxu0 %v100
    %v171 = vpop.f32.mrf.mxu0
    %v172 = vadd.f32 %v91, %v171
    %v173 = vpop.f32.mrf.mxu0
    %v174 = vadd.f32 %v95, %v173
    %175 = vmatprep.mubr.f32.mxu0 0.0
    %176 = vmatmul.mubr.f32.gmra.mxu0 %v103
    %v177 = vpop.f32.mrf.mxu0
    %v178 = vadd.f32 %v91, %v177
    %v179 = vpop.f32.mrf.mxu0
    %v180 = vadd.f32 %v95, %v179
    %181 = vdwg.mxu0
    %v182 = vmax.f32 %v172, 0.0
    %v183 = vmax.f32 %v174, 0.0
    %v184 = vmax.f32 %v178, 0.0
    %v185 = vmax.f32 %v180, 0.0
    %v186 = vld [vmem:[#allocation9] sm:$0xff]
    %v187 = vld [vmem:[#allocation9 + $0x8] sm:$0xff]
    %v188 = vld [vmem:[#allocation9 + $0x10] sm:$0xff]
    %v189 = vld [vmem:[#allocation9 + $0x18] sm:$0xff]
    %v190 = vld [vmem:[#allocation9 + $0x20] sm:$0xff]
    %v191 = vld [vmem:[#allocation9 + $0x28] sm:$0xff]
    %v192 = vld [vmem:[#allocation9 + $0x30] sm:$0xff]
    %v193 = vld [vmem:[#allocation9 + $0x38] sm:$0xff]
    %v194 = vld [vmem:[#allocation9 + $0x40] sm:$0xff]
    %v195 = vld [vmem:[#allocation9 + $0x48] sm:$0xff]
    %v196 = vld [vmem:[#allocation9 + $0x50] sm:$0xff]
    %v197 = vld [vmem:[#allocation9 + $0x58] sm:$0xff]
    %v198 = vld [vmem:[#allocation9 + $0x60] sm:$0xff]
    %v199 = vld [vmem:[#allocation9 + $0x68] sm:$0xff]
    %v200 = vld [vmem:[#allocation9 + $0x70] sm:$0xff]
    %v201 = vld [vmem:[#allocation9 + $0x78] sm:$0xff]
    %v202 = vld [vmem:[#allocation9 + $0x80] sm:$0xff]
    %v203 = vld [vmem:[#allocation9 + $0x88] sm:$0xff]
    %v204 = vld [vmem:[#allocation9 + $0x90] sm:$0xff]
    %v205 = vld [vmem:[#allocation9 + $0x98] sm:$0xff]
    %v206 = vld [vmem:[#allocation9 + $0xa0] sm:$0xff]
    %v207 = vld [vmem:[#allocation9 + $0xa8] sm:$0xff]
    %v208 = vld [vmem:[#allocation9 + $0xb0] sm:$0xff]
    %v209 = vld [vmem:[#allocation9 + $0xb8] sm:$0xff]
    %v210 = vld [vmem:[#allocation9 + $0xc0] sm:$0xff]
    %v211 = vld [vmem:[#allocation9 + $0xc8] sm:$0xff]
    %v212 = vld [vmem:[#allocation9 + $0xd0] sm:$0xff]
    %v213 = vld [vmem:[#allocation9 + $0xd8] sm:$0xff]
    %v214 = vld [vmem:[#allocation9 + $0xe0] sm:$0xff]
    %v215 = vld [vmem:[#allocation9 + $0xe8] sm:$0xff]
    %v216 = vld [vmem:[#allocation9 + $0xf0] sm:$0xff]
    %v217 = vld [vmem:[#allocation9 + $0xf8] sm:$0xff]
    %v218 = vld [vmem:[%s5] sm:$0x1]
    %v220 = vlaneseq
    %v221 = vshrl.u32 %v220, 7
    %v222 = vsub.s32 0, %v221
    %v223 = vrot.slane %v218, %v222
    %225 = vmatprep.subr.mxu0 0.0
    %226 = vmatpush1.msra.mxu0 %v201
    %227 = vmatprep.subr.mxu0 0.0
    %228 = vmatpush1.msra.mxu0 %v200
    %229 = vmatprep.subr.mxu0 0.0
    %230 = vmatpush1.msra.mxu0 %v199
    %231 = vmatprep.subr.mxu0 0.0
    %232 = vmatpush1.msra.mxu0 %v198
    %233 = vmatprep.subr.mxu0 0.0
    %234 = vmatpush1.msra.mxu0 %v197
    %235 = vmatprep.subr.mxu0 0.0
    %236 = vmatpush1.msra.mxu0 %v196
    %237 = vmatprep.subr.mxu0 0.0
    %238 = vmatpush1.msra.mxu0 %v195
    %239 = vmatprep.subr.mxu0 0.0
    %240 = vmatpush1.msra.mxu0 %v194
    %241 = vmatprep.subr.mxu0 0.0
    %242 = vmatpush1.msra.mxu0 %v193
    %243 = vmatprep.subr.mxu0 0.0
    %244 = vmatpush1.msra.mxu0 %v192
    %245 = vmatprep.subr.mxu0 0.0
    %246 = vmatpush1.msra.mxu0 %v191
    %247 = vmatprep.subr.mxu0 0.0
    %248 = vmatpush1.msra.mxu0 %v190
    %249 = vmatprep.subr.mxu0 0.0
    %250 = vmatpush1.msra.mxu0 %v189
    %251 = vmatprep.subr.mxu0 0.0
    %252 = vmatpush1.msra.mxu0 %v188
    %253 = vmatprep.subr.mxu0 0.0
    %254 = vmatpush1.msra.mxu0 %v187
    %255 = vmatprep.subr.mxu0 0.0
    %256 = vmatpush1.msra.mxu0 %v186
    %257 = vmatprep.subr.mxu0 0.0
    %258 = vmatpush2.msra.mxu0 %v217
    %259 = vmatprep.subr.mxu0 0.0
    %260 = vmatpush2.msra.mxu0 %v216
    %261 = vmatprep.subr.mxu0 0.0
    %262 = vmatpush2.msra.mxu0 %v215
    %263 = vmatprep.subr.mxu0 0.0
    %264 = vmatpush2.msra.mxu0 %v214
    %265 = vmatprep.subr.mxu0 0.0
    %266 = vmatpush2.msra.mxu0 %v213
    %267 = vmatprep.subr.mxu0 0.0
    %268 = vmatpush2.msra.mxu0 %v212
    %269 = vmatprep.subr.mxu0 0.0
    %270 = vmatpush2.msra.mxu0 %v211
    %271 = vmatprep.subr.mxu0 0.0
    %272 = vmatpush2.msra.mxu0 %v210
    %273 = vmatprep.subr.mxu0 0.0
    %274 = vmatpush2.msra.mxu0 %v209
    %275 = vmatprep.subr.mxu0 0.0
    %276 = vmatpush2.msra.mxu0 %v208
    %277 = vmatprep.subr.mxu0 0.0
    %278 = vmatpush2.msra.mxu0 %v207
    %279 = vmatprep.subr.mxu0 0.0
    %280 = vmatpush2.msra.mxu0 %v206
    %281 = vmatprep.subr.mxu0 0.0
    %282 = vmatpush2.msra.mxu0 %v205
    %283 = vmatprep.subr.mxu0 0.0
    %284 = vmatpush2.msra.mxu0 %v204
    %285 = vmatprep.subr.mxu0 0.0
    %286 = vmatpush2.msra.mxu0 %v203
    %287 = vmatprep.subr.mxu0 0.0
    %288 = vmatpush2.msra.mxu0 %v202
    %289 = vmatprep.mubr.f32.mxu0 %v183
    %290 = vmatmul.mubr.f32.gmra.mxu0 %v182
    %v291 = vpop.f32.mrf.mxu0
    %v292 = vadd.f32 %v223, %v291
    %v293 = vpop.f32.mrf.mxu0
    %294 = vmatprep.mubr.f32.mxu0 %v185
    %295 = vmatmul.mubr.f32.gmra.mxu0 %v184
    %v296 = vpop.f32.mrf.mxu0
    %v297 = vadd.f32 %v223, %v296
    %v298 = vpop.f32.mrf.mxu0
    %299 = vdwg.mxu0
    %v300 = vmax.f32 %v292, 0.0
    %v301 = vmax.f32 %v297, 0.0
    %302 = vst [vmem:[#allocation10] sm:$0xff] %v300
    %303 = vst [vmem:[#allocation10 + $0x8] sm:$0xff] %v301
    // Predicated region
    $region34: #{tpu_custom_call.1} parent=1 // pred_check
      _
    $region35: #{tpu_custom_call.1} parent=1 // pred_check_branch
      %305 = sbr.rel (0) target = $region37
    $region36: #{tpu_custom_call.1} parent=1 // pred_region
      %s307 = ssub.s32 256, 256
      %308 = vsyncadd [#allocation6], %s307
      %s309 = sshll.u32 [#allocation10], 4
      %s310 = int_to_ptr.vmem [resolvable:$true] %s309
      %315 = dma.vmem_to_hbm [thread:$0]  %s310, 256, %s6, [#allocation6], 128, 128, 8
    $region37: #{tpu_custom_call.1} parent=1 // pred_fallthru
      _
    // Predicated region
    $region38: #{tpu_custom_call.1} parent=1 // pred_check
      _
    $region39: #{tpu_custom_call.1} parent=1 // pred_check_branch
      %317 = sbr.rel (0) target = $region41
    $region40: #{tpu_custom_call.1} parent=1 // pred_region
      %318 = dma.done [#allocation6], 256
    $region41: #{tpu_custom_call.1} parent=1 // pred_fallthru
      _
    %319 = vsyncpa [#allocation5], 1
    %320 = vsyncpa [#allocation8], 1
    %321 = vsyncpa [#allocation6], 1

</llo_original>
